<compile_context>
chip_gen: v6e
topology: v6e:2x2x1
jax: 0.10.0
libtpu: 0.0.40
codegen_flags: <defaults>
</compile_context>

<pallas_src>
import jax
import jax.numpy as jnp
from jax import lax
from jax.experimental import pallas as pl
from jax.experimental.pallas import tpu as pltpu


# ---------------------------------------------------------------------------
# Fused conv + BatchNorm(batch stats) + SiLU
# ---------------------------------------------------------------------------
def conv_bn_silu(x_nchw, w_hwio, gamma, beta, *, eps=1e-5):
    N, Cin, H, W = x_nchw.shape
    kh, kw, _, Cout = w_hwio.shape
    assert kh == kw, "square kernel assumed"
    p = (kh - 1) // 2                         # stride=1, dilation=1 ("same" conv)
    Hp, Wp = H + 2 * p, W + 2 * p
    assert Wp == W + kw - 1, "this implementation assumes s=1, d=1, p=(k-1)//2"

    lane = W * Cout                           # packed output lane width (=128 here)
    k_true = Wp * Cin                         # true contraction width (=72 here)
    Kpad = ((k_true + 127) // 128) * 128      # zero-pad K to a full lane multiple (=128)

    # ---- wrapper glue: NCHW -> NHWC, zero pad spatially, flatten rows, pad K to 128
    x = jnp.transpose(x_nchw, (0, 2, 3, 1))                          # (N, H, W, Cin)
    xp = jnp.pad(x, ((0, 0), (p, p), (p, p), (0, 0)))                # (N, Hp, Wp, Cin)
    xp_flat = xp.reshape(N * Hp, k_true)
    xp_flat = jnp.pad(xp_flat, ((0, 0), (0, Kpad - k_true))).astype(jnp.bfloat16)

    # ---- block-Toeplitz (along width) weight slabs: one (Kpad, W*Cout) matrix per dh
    #      wt[dh][(w+dw)*Cin + ci, w*Cout + co] = w_hwio[dh, dw, ci, co]; rows >= Wp*Cin are 0.
    eye_w = jnp.eye(W, dtype=jnp.float32)
    slabs = []
    for dh in range(kh):
        acc = jnp.zeros((Kpad, lane), jnp.float32)
        for dw in range(kw):
            blk = jnp.kron(eye_w, w_hwio[dh, dw].astype(jnp.float32))  # (W*Cin, W*Cout)
            acc = acc + jnp.pad(
                blk, ((dw * Cin, Kpad - (W + dw) * Cin), (0, 0)))
        slabs.append(acc)
    wt = jnp.stack(slabs).astype(jnp.bfloat16)                       # (kh, Kpad, W*Cout)

    # ---- tiny 0/1 matrices mapping the packed (w, cout) lane layout <-> cout
    r_mat = jnp.tile(jnp.eye(Cout, dtype=jnp.float32), (W, 1))       # (W*Cout, Cout)
    rt_mat = r_mat.T                                                 # (Cout, W*Cout)

    gamma2 = gamma.reshape(1, Cout).astype(jnp.float32)
    beta2 = beta.reshape(1, Cout).astype(jnp.float32)

    inv_count = 1.0 / float(N * H * W)

    def kernel(xp_ref, wt_ref, g_ref, b_ref, r_ref, rt_ref, out_ref):
        # One big matmul per kernel row over the whole stacked padded batch (M = N*Hp).
        x_all = xp_ref[...]                                          # (N*Hp, Kpad) bf16
        z = [jnp.dot(x_all, wt_ref[dh], preferred_element_type=jnp.float32)
             for dh in range(kh)]                                    # kh x (N*Hp, lane) f32

        # Shift-add the f32 results per image (static, unrolled: N is tiny), accumulate
        # BN batch statistics lane-dense per (w, cout), stash pre-BN output in out_ref (VMEM).
        s = jnp.zeros((1, lane), jnp.float32)
        sq = jnp.zeros((1, lane), jnp.float32)
        for n in range(N):
            y_n = z[0][n * Hp:n * Hp + H, :]
            for dh in range(1, kh):
                y_n = y_n + z[dh][n * Hp + dh:n * Hp + dh + H, :]
            s = s + jnp.sum(y_n, axis=0, keepdims=True)
            sq = sq + jnp.sum(y_n * y_n, axis=0, keepdims=True)
            out_ref[pl.ds(n * H, H), :] = y_n

        # BN finalize: fold scale/shift per channel, broadcast back to (w, cout) lanes, SiLU.
        ch_sum = jnp.dot(s, r_ref[...], preferred_element_type=jnp.float32)   # (1, Cout)
        ch_sq = jnp.dot(sq, r_ref[...], preferred_element_type=jnp.float32)   # (1, Cout)
        mean = ch_sum * inv_count
        var = ch_sq * inv_count - mean * mean           # biased var (PyTorch BN train mode)
        scale = g_ref[...] * lax.rsqrt(var + eps)
        shift = b_ref[...] - mean * scale
        scale_wc = jnp.dot(scale, rt_ref[...], preferred_element_type=jnp.float32)
        shift_wc = jnp.dot(shift, rt_ref[...], preferred_element_type=jnp.float32)
        zz = out_ref[...] * scale_wc + shift_wc
        out_ref[...] = zz * pl.reciprocal(1.0 + jnp.exp(-zz), approx=True)    # SiLU

    out_packed = pl.pallas_call(
        kernel,
        out_shape=jax.ShapeDtypeStruct((N * H, lane), jnp.float32),
        grid_spec=pltpu.PrefetchScalarGridSpec(
            num_scalar_prefetch=0,
            grid=(1,),                                    # whole batch in a single step
            in_specs=[
                pl.BlockSpec((N * Hp, Kpad), lambda i: (0, 0)),
                pl.BlockSpec((kh, Kpad, lane), lambda i: (0, 0, 0)),
                pl.BlockSpec((1, Cout), lambda i: (0, 0)),
                pl.BlockSpec((1, Cout), lambda i: (0, 0)),
                pl.BlockSpec((lane, Cout), lambda i: (0, 0)),
                pl.BlockSpec((Cout, lane), lambda i: (0, 0)),
            ],
            out_specs=pl.BlockSpec((N * H, lane), lambda i: (0, 0)),
        ),
        compiler_params=pltpu.CompilerParams(
            dimension_semantics=("arbitrary",),
        ),
    )(xp_flat, wt, gamma2, beta2, r_mat, rt_mat)

    # (N*H, W*Cout) -> (N, H, W, Cout) -> NCHW (matches the PyTorch module's layout)
    out = out_packed.reshape(N, H, W, Cout)
    return jnp.transpose(out, (0, 3, 1, 2))


# ---------------------------------------------------------------------------
# Pure-JAX reference for a correctness check
# ---------------------------------------------------------------------------
def reference(x_nchw, w_hwio, gamma, beta, eps=1e-5):
    y = lax.conv_general_dilated(
        x_nchw.astype(jnp.float32),
        w_hwio.astype(jnp.float32),
        window_strides=(1, 1),
        padding="SAME",
        dimension_numbers=("NCHW", "HWIO", "NCHW"),
    )
    mean = jnp.mean(y, axis=(0, 2, 3), keepdims=True)
    var = jnp.mean((y - mean) ** 2, axis=(0, 2, 3), keepdims=True)
    z = (y - mean) / jnp.sqrt(var + eps) * gamma.reshape(1, -1, 1, 1) \
        + beta.reshape(1, -1, 1, 1)
    return z * jax.nn.sigmoid(z)


if __name__ == "__main__":
    key = jax.random.PRNGKey(0)
    k_x, k_w, k_g, k_b = jax.random.split(key, 4)

    N, Cin, H, W = 2, 4, 16, 16
    Cout, ksz = 8, 3

    x = jax.random.normal(k_x, (N, Cin, H, W), dtype=jnp.float32)
    w = jax.random.normal(k_w, (ksz, ksz, Cin, Cout), dtype=jnp.float32) * 0.1
    gamma = 1.0 + 0.1 * jax.random.normal(k_g, (Cout,), dtype=jnp.float32)
    beta = 0.1 * jax.random.normal(k_b, (Cout,), dtype=jnp.float32)

    fused = jax.jit(conv_bn_silu)            # caches the wrapper glue + slab construction
    out = fused(x, w, gamma, beta)
    out = jax.block_until_ready(out)

    ref = reference(x, w, gamma, beta)
    assert out.shape == (N, Cout, H, W)
    # bf16 matmul inputs (f32 accumulation) + approx reciprocal -> loosened tolerance
    assert jnp.allclose(out, ref, atol=3e-2, rtol=3e-2), "mismatch vs reference"

    print("KERNEL_OK")
</pallas_src>

<mosaic_0001>
module attributes {stable_mosaic.version = 11 : i64} {
  func.func @kernel(%arg0: i32, %arg1: memref<36x128xbf16, #tpu.memory_space<vmem>>, %arg2: memref<3x128x128xbf16, #tpu.memory_space<vmem>>, %arg3: memref<1x8xf32, #tpu.memory_space<vmem>>, %arg4: memref<1x8xf32, #tpu.memory_space<vmem>>, %arg5: memref<128x8xf32, #tpu.memory_space<vmem>>, %arg6: memref<8x128xf32, #tpu.memory_space<vmem>>, %arg7: memref<32x128xf32, #tpu.memory_space<vmem>>) attributes {dimension_semantics = [#tpu.dimension_semantics<arbitrary>], iteration_bounds = array<i64: 1>, scalar_prefetch = 0 : i64, scratch_operands = 0 : i64, tpu.core_type = #tpu.core_type<tc>, window_params = [{pipeline_mode = #tpu.pipeline_mode<synchronous>, transform_indices = @transform_0, window_bounds = array<i64: 36, 128>}, {pipeline_mode = #tpu.pipeline_mode<synchronous>, transform_indices = @transform_1, window_bounds = array<i64: 3, 128, 128>}, {pipeline_mode = #tpu.pipeline_mode<synchronous>, transform_indices = @transform_2, window_bounds = array<i64: 1, 8>}, {pipeline_mode = #tpu.pipeline_mode<synchronous>, transform_indices = @transform_3, window_bounds = array<i64: 1, 8>}, {pipeline_mode = #tpu.pipeline_mode<synchronous>, transform_indices = @transform_4, window_bounds = array<i64: 128, 8>}, {pipeline_mode = #tpu.pipeline_mode<synchronous>, transform_indices = @transform_5, window_bounds = array<i64: 8, 128>}, {pipeline_mode = #tpu.pipeline_mode<synchronous>, transform_indices = @transform_6, window_bounds = array<i64: 32, 128>}]} {
    %c0 = arith.constant 0 : index
    %c0_0 = arith.constant 0 : index
    %0 = vector.load %arg1[%c0, %c0_0] : memref<36x128xbf16, #tpu.memory_space<vmem>>, vector<36x128xbf16>
    %c0_1 = arith.constant 0 : index
    %c0_2 = arith.constant 0 : index
    %c0_3 = arith.constant 0 : index
    %1 = vector.load %arg2[%c0_1, %c0_2, %c0_3] : memref<3x128x128xbf16, #tpu.memory_space<vmem>>, vector<1x128x128xbf16>
    %2 = vector.shape_cast %1 : vector<1x128x128xbf16> to vector<128x128xbf16>
    %cst = arith.constant dense<0.000000e+00> : vector<36x128xf32>
    %3 = tpu.matmul %0, %2, %cst {dimension_numbers = #tpu.dot_dimension_numbers<[1], [0], [0], [1], [0, 0, 1, 1], [], []>} : vector<36x128xbf16>, vector<128x128xbf16>, vector<36x128xf32> -> vector<36x128xf32>
    %c1 = arith.constant 1 : index
    %c0_4 = arith.constant 0 : index
    %c0_5 = arith.constant 0 : index
    %4 = vector.load %arg2[%c1, %c0_4, %c0_5] : memref<3x128x128xbf16, #tpu.memory_space<vmem>>, vector<1x128x128xbf16>
    %5 = vector.shape_cast %4 : vector<1x128x128xbf16> to vector<128x128xbf16>
    %cst_6 = arith.constant dense<0.000000e+00> : vector<36x128xf32>
    %6 = tpu.matmul %0, %5, %cst_6 {dimension_numbers = #tpu.dot_dimension_numbers<[1], [0], [0], [1], [0, 0, 1, 1], [], []>} : vector<36x128xbf16>, vector<128x128xbf16>, vector<36x128xf32> -> vector<36x128xf32>
    %c2 = arith.constant 2 : index
    %c0_7 = arith.constant 0 : index
    %c0_8 = arith.constant 0 : index
    %7 = vector.load %arg2[%c2, %c0_7, %c0_8] : memref<3x128x128xbf16, #tpu.memory_space<vmem>>, vector<1x128x128xbf16>
    %8 = vector.shape_cast %7 : vector<1x128x128xbf16> to vector<128x128xbf16>
    %cst_9 = arith.constant dense<0.000000e+00> : vector<36x128xf32>
    %9 = tpu.matmul %0, %8, %cst_9 {dimension_numbers = #tpu.dot_dimension_numbers<[1], [0], [0], [1], [0, 0, 1, 1], [], []>} : vector<36x128xbf16>, vector<128x128xbf16>, vector<36x128xf32> -> vector<36x128xf32>
    %cst_10 = arith.constant 0.000000e+00 : f32
    %10 = vector.broadcast %cst_10 : f32 to vector<1x128xf32>
    %cst_11 = arith.constant 0.000000e+00 : f32
    %11 = vector.broadcast %cst_11 : f32 to vector<1x128xf32>
    %12 = vector.extract_strided_slice %3 {offsets = [0, 0], sizes = [16, 128], strides = [1, 1]} : vector<36x128xf32> to vector<16x128xf32>
    %13 = vector.extract_strided_slice %6 {offsets = [1, 0], sizes = [16, 128], strides = [1, 1]} : vector<36x128xf32> to vector<16x128xf32>
    %14 = arith.addf %12, %13 : vector<16x128xf32>
    %15 = vector.extract_strided_slice %9 {offsets = [2, 0], sizes = [16, 128], strides = [1, 1]} : vector<36x128xf32> to vector<16x128xf32>
    %16 = arith.addf %14, %15 : vector<16x128xf32>
    %cst_12 = arith.constant dense<0.000000e+00> : vector<128xf32>
    %17 = vector.multi_reduction <add>, %16, %cst_12 [0] : vector<16x128xf32> to vector<128xf32>
    %18 = vector.shape_cast %17 : vector<128xf32> to vector<1x128xf32>
    %19 = arith.addf %10, %18 : vector<1x128xf32>
    %20 = arith.mulf %16, %16 : vector<16x128xf32>
    %cst_13 = arith.constant dense<0.000000e+00> : vector<128xf32>
    %21 = vector.multi_reduction <add>, %20, %cst_13 [0] : vector<16x128xf32> to vector<128xf32>
    %22 = vector.shape_cast %21 : vector<128xf32> to vector<1x128xf32>
    %23 = arith.addf %11, %22 : vector<1x128xf32>
    %c0_14 = arith.constant 0 : index
    %c0_15 = arith.constant 0 : index
    %24 = vector.load %arg7[%c0_14, %c0_15] : memref<32x128xf32, #tpu.memory_space<vmem>>, vector<16x128xf32>
    tpu.vector_store %arg7[%c0_14, %c0_15], %16 {strides = array<i32>} : memref<32x128xf32, #tpu.memory_space<vmem>>, vector<16x128xf32>,
    %25 = vector.extract_strided_slice %3 {offsets = [18, 0], sizes = [16, 128], strides = [1, 1]} : vector<36x128xf32> to vector<16x128xf32>
    %26 = vector.extract_strided_slice %6 {offsets = [19, 0], sizes = [16, 128], strides = [1, 1]} : vector<36x128xf32> to vector<16x128xf32>
    %27 = arith.addf %25, %26 : vector<16x128xf32>
    %28 = vector.extract_strided_slice %9 {offsets = [20, 0], sizes = [16, 128], strides = [1, 1]} : vector<36x128xf32> to vector<16x128xf32>
    %29 = arith.addf %27, %28 : vector<16x128xf32>
    %cst_16 = arith.constant dense<0.000000e+00> : vector<128xf32>
    %30 = vector.multi_reduction <add>, %29, %cst_16 [0] : vector<16x128xf32> to vector<128xf32>
    %31 = vector.shape_cast %30 : vector<128xf32> to vector<1x128xf32>
    %32 = arith.addf %19, %31 : vector<1x128xf32>
    %33 = arith.mulf %29, %29 : vector<16x128xf32>
    %cst_17 = arith.constant dense<0.000000e+00> : vector<128xf32>
    %34 = vector.multi_reduction <add>, %33, %cst_17 [0] : vector<16x128xf32> to vector<128xf32>
    %35 = vector.shape_cast %34 : vector<128xf32> to vector<1x128xf32>
    %36 = arith.addf %23, %35 : vector<1x128xf32>
    %c16 = arith.constant 16 : index
    %c0_18 = arith.constant 0 : index
    %37 = vector.load %arg7[%c16, %c0_18] : memref<32x128xf32, #tpu.memory_space<vmem>>, vector<16x128xf32>
    tpu.vector_store %arg7[%c16, %c0_18], %29 {strides = array<i32>} : memref<32x128xf32, #tpu.memory_space<vmem>>, vector<16x128xf32>,
    %c0_19 = arith.constant 0 : index
    %c0_20 = arith.constant 0 : index
    %38 = vector.load %arg5[%c0_19, %c0_20] : memref<128x8xf32, #tpu.memory_space<vmem>>, vector<128x8xf32>
    %cst_21 = arith.constant dense<0.000000e+00> : vector<1x8xf32>
    %39 = tpu.matmul %32, %38, %cst_21 {dimension_numbers = #tpu.dot_dimension_numbers<[1], [0], [0], [1], [0, 0, 1, 1], [], []>} : vector<1x128xf32>, vector<128x8xf32>, vector<1x8xf32> -> vector<1x8xf32>
    %c0_22 = arith.constant 0 : index
    %c0_23 = arith.constant 0 : index
    %40 = vector.load %arg5[%c0_22, %c0_23] : memref<128x8xf32, #tpu.memory_space<vmem>>, vector<128x8xf32>
    %cst_24 = arith.constant dense<0.000000e+00> : vector<1x8xf32>
    %41 = tpu.matmul %36, %40, %cst_24 {dimension_numbers = #tpu.dot_dimension_numbers<[1], [0], [0], [1], [0, 0, 1, 1], [], []>} : vector<1x128xf32>, vector<128x8xf32>, vector<1x8xf32> -> vector<1x8xf32>
    %cst_25 = arith.constant 0.001953125 : f32
    %42 = vector.broadcast %cst_25 : f32 to vector<1x8xf32>
    %43 = arith.mulf %39, %42 : vector<1x8xf32>
    %cst_26 = arith.constant 0.001953125 : f32
    %44 = vector.broadcast %cst_26 : f32 to vector<1x8xf32>
    %45 = arith.mulf %41, %44 : vector<1x8xf32>
    %46 = arith.mulf %43, %43 : vector<1x8xf32>
    %47 = arith.subf %45, %46 : vector<1x8xf32>
    %c0_27 = arith.constant 0 : index
    %c0_28 = arith.constant 0 : index
    %48 = vector.load %arg3[%c0_27, %c0_28] : memref<1x8xf32, #tpu.memory_space<vmem>>, vector<1x8xf32>
    %cst_29 = arith.constant 9.99999974E-6 : f32
    %49 = vector.broadcast %cst_29 : f32 to vector<1x8xf32>
    %50 = arith.addf %47, %49 : vector<1x8xf32>
    %51 = math.rsqrt %50 : vector<1x8xf32>
    %52 = arith.mulf %48, %51 : vector<1x8xf32>
    %c0_30 = arith.constant 0 : index
    %c0_31 = arith.constant 0 : index
    %53 = vector.load %arg4[%c0_30, %c0_31] : memref<1x8xf32, #tpu.memory_space<vmem>>, vector<1x8xf32>
    %54 = arith.mulf %43, %52 : vector<1x8xf32>
    %55 = arith.subf %53, %54 : vector<1x8xf32>
    %c0_32 = arith.constant 0 : index
    %c0_33 = arith.constant 0 : index
    %56 = vector.load %arg6[%c0_32, %c0_33] : memref<8x128xf32, #tpu.memory_space<vmem>>, vector<8x128xf32>
    %cst_34 = arith.constant dense<0.000000e+00> : vector<1x128xf32>
    %57 = tpu.matmul %52, %56, %cst_34 {dimension_numbers = #tpu.dot_dimension_numbers<[1], [0], [0], [1], [0, 0, 1, 1], [], []>} : vector<1x8xf32>, vector<8x128xf32>, vector<1x128xf32> -> vector<1x128xf32>
    %c0_35 = arith.constant 0 : index
    %c0_36 = arith.constant 0 : index
    %58 = vector.load %arg6[%c0_35, %c0_36] : memref<8x128xf32, #tpu.memory_space<vmem>>, vector<8x128xf32>
    %cst_37 = arith.constant dense<0.000000e+00> : vector<1x128xf32>
    %59 = tpu.matmul %55, %58, %cst_37 {dimension_numbers = #tpu.dot_dimension_numbers<[1], [0], [0], [1], [0, 0, 1, 1], [], []>} : vector<1x8xf32>, vector<8x128xf32>, vector<1x128xf32> -> vector<1x128xf32>
    %c0_38 = arith.constant 0 : index
    %c0_39 = arith.constant 0 : index
    %60 = vector.load %arg7[%c0_38, %c0_39] : memref<32x128xf32, #tpu.memory_space<vmem>>, vector<32x128xf32>
    %61 = vector.broadcast %57 : vector<1x128xf32> to vector<32x128xf32>
    %62 = arith.mulf %60, %61 : vector<32x128xf32>
    %63 = vector.broadcast %59 : vector<1x128xf32> to vector<32x128xf32>
    %64 = arith.addf %62, %63 : vector<32x128xf32>
    %cst_40 = arith.constant 0.000000e+00 : f32
    %65 = vector.broadcast %cst_40 : f32 to vector<32x128xf32>
    %66 = arith.subf %65, %64 : vector<32x128xf32>
    %67 = math.exp %66 : vector<32x128xf32>
    %cst_41 = arith.constant 1.000000e+00 : f32
    %68 = vector.broadcast %cst_41 : f32 to vector<32x128xf32>
    %69 = arith.addf %68, %67 : vector<32x128xf32>
    %70 = tpu.reciprocal %69 {approx = true} : vector<32x128xf32> -> vector<32x128xf32>
    %71 = arith.mulf %64, %70 : vector<32x128xf32>
    %c0_42 = arith.constant 0 : index
    %c0_43 = arith.constant 0 : index
    %72 = vector.load %arg7[%c0_42, %c0_43] : memref<32x128xf32, #tpu.memory_space<vmem>>, vector<32x128xf32>
    tpu.vector_store %arg7[%c0_42, %c0_43], %71 {strides = array<i32>} : memref<32x128xf32, #tpu.memory_space<vmem>>, vector<32x128xf32>,
    return
  }
  func.func @transform_0(%arg0: i32) -> (i32, i32) {
    %c0_i32 = arith.constant 0 : i32
    %c0_i32_0 = arith.constant 0 : i32
    %c0_i32_1 = arith.constant 0 : i32
    return %c0_i32, %c0_i32_0 : i32, i32
  }
  func.func @transform_1(%arg0: i32) -> (i32, i32, i32) {
    %c0_i32 = arith.constant 0 : i32
    %c0_i32_0 = arith.constant 0 : i32
    %c0_i32_1 = arith.constant 0 : i32
    %c0_i32_2 = arith.constant 0 : i32
    return %c0_i32, %c0_i32_0, %c0_i32_1 : i32, i32, i32
  }
  func.func @transform_2(%arg0: i32) -> (i32, i32) {
    %c0_i32 = arith.constant 0 : i32
    %c0_i32_0 = arith.constant 0 : i32
    %c0_i32_1 = arith.constant 0 : i32
    return %c0_i32, %c0_i32_0 : i32, i32
  }
  func.func @transform_3(%arg0: i32) -> (i32, i32) {
    %c0_i32 = arith.constant 0 : i32
    %c0_i32_0 = arith.constant 0 : i32
    %c0_i32_1 = arith.constant 0 : i32
    return %c0_i32, %c0_i32_0 : i32, i32
  }
  func.func @transform_4(%arg0: i32) -> (i32, i32) {
    %c0_i32 = arith.constant 0 : i32
    %c0_i32_0 = arith.constant 0 : i32
    %c0_i32_1 = arith.constant 0 : i32
    return %c0_i32, %c0_i32_0 : i32, i32
  }
  func.func @transform_5(%arg0: i32) -> (i32, i32) {
    %c0_i32 = arith.constant 0 : i32
    %c0_i32_0 = arith.constant 0 : i32
    %c0_i32_1 = arith.constant 0 : i32
    return %c0_i32, %c0_i32_0 : i32, i32
  }
  func.func @transform_6(%arg0: i32) -> (i32, i32) {
    %c0_i32 = arith.constant 0 : i32
    %c0_i32_0 = arith.constant 0 : i32
    %c0_i32_1 = arith.constant 0 : i32
    return %c0_i32, %c0_i32_0 : i32, i32
  }
}

</mosaic_0001>

<llo_original>
// kernel: tile.9
$region0: #{tile.9}
  %s0 = inlined_call_operand.vmem [shape: f32[16,8,8], index: 0, kind: input, shape index: {}]
  %s1 = inlined_call_operand.vmem [shape: f32[128,8], index: 1, kind: output, shape index: {}]
  %s2 = smov 3
  %v3 = vld [vmem:[%s0] ss:$16 sm:%s2]
  %s4 = smov 12
  %v5 = vld [vmem:[%s0] ss:$16 sm:%s4]
  %vm6 = vcmask 1043458
  %v7 = vsel %vm6, %v5, %v3
  %s8 = smov 48
  %v9 = vld [vmem:[%s0] ss:$16 sm:%s8]
  %vm10 = vcmask 1045508
  %v11 = vsel %vm10, %v9, %v7
  %s12 = smov 192
  %v13 = vld [vmem:[%s0] ss:$16 sm:%s12]
  %vm14 = vcmask 1047558
  %v15 = vsel %vm14, %v13, %v11
  %vm16 = vcmask 64512
  %17 = vst.msk [vmem:[%s1] sm:$0xff] %vm16, %v15
  %s18 = scalar_lea.vmem %s0, 15
  %s19 = smov 3
  %v20 = vld [vmem:[%s18] ss:$16 sm:%s19]
  %s21 = scalar_lea.vmem %s0, 15
  %s22 = smov 12
  %v23 = vld [vmem:[%s21] ss:$16 sm:%s22]
  %vm24 = vcmask 1043458
  %v25 = vsel %vm24, %v23, %v20
  %s26 = scalar_lea.vmem %s0, 15
  %s27 = smov 48
  %v28 = vld [vmem:[%s26] ss:$16 sm:%s27]
  %vm29 = vcmask 1045508
  %v30 = vsel %vm29, %v28, %v25
  %s31 = scalar_lea.vmem %s0, 15
  %s32 = smov 192
  %v33 = vld [vmem:[%s31] ss:$16 sm:%s32]
  %vm34 = vcmask 1047558
  %v35 = vsel %vm34, %v33, %v30
  %36 = vrot.lane.b32.xlu0 %v35, 120
  %v37 = vpop.permute.xlu0 %36
  %vm38 = vcmask 1048512
  %39 = vst.msk [vmem:[%s1] sm:$0xff] %vm38, %v37
  %s40 = scalar_lea.vmem %s0, 14
  %s41 = smov 3
  %v42 = vld [vmem:[%s40] ss:$16 sm:%s41]
  %s43 = scalar_lea.vmem %s0, 14
  %s44 = smov 12
  %v45 = vld [vmem:[%s43] ss:$16 sm:%s44]
  %vm46 = vcmask 1043458
  %v47 = vsel %vm46, %v45, %v42
  %s48 = scalar_lea.vmem %s0, 14
  %s49 = smov 48
  %v50 = vld [vmem:[%s48] ss:$16 sm:%s49]
  %vm51 = vcmask 1045508
  %v52 = vsel %vm51, %v50, %v47
  %s53 = scalar_lea.vmem %s0, 14
  %s54 = smov 192
  %v55 = vld [vmem:[%s53] ss:$16 sm:%s54]
  %vm56 = vcmask 1047558
  %v57 = vsel %vm56, %v55, %v52
  %58 = vrot.lane.b32.xlu0 %v57, 112
  %v59 = vpop.permute.xlu0 %58
  %vm60 = vcmask 982912
  %61 = vst.msk [vmem:[%s1] sm:$0xff] %vm60, %v59
  %s62 = scalar_lea.vmem %s0, 13
  %s63 = smov 3
  %v64 = vld [vmem:[%s62] ss:$16 sm:%s63]
  %s65 = scalar_lea.vmem %s0, 13
  %s66 = smov 12
  %v67 = vld [vmem:[%s65] ss:$16 sm:%s66]
  %vm68 = vcmask 1043458
  %v69 = vsel %vm68, %v67, %v64
  %s70 = scalar_lea.vmem %s0, 13
  %s71 = smov 48
  %v72 = vld [vmem:[%s70] ss:$16 sm:%s71]
  %vm73 = vcmask 1045508
  %v74 = vsel %vm73, %v72, %v69
  %s75 = scalar_lea.vmem %s0, 13
  %s76 = smov 192
  %v77 = vld [vmem:[%s75] ss:$16 sm:%s76]
  %vm78 = vcmask 1047558
  %v79 = vsel %vm78, %v77, %v74
  %80 = vrot.lane.b32.xlu0 %v79, 104
  %v81 = vpop.permute.xlu0 %80
  %vm82 = vcmask 917312
  %83 = vst.msk [vmem:[%s1] sm:$0xff] %vm82, %v81
  %s84 = scalar_lea.vmem %s0, 12
  %s85 = smov 3
  %v86 = vld [vmem:[%s84] ss:$16 sm:%s85]
  %s87 = scalar_lea.vmem %s0, 12
  %s88 = smov 12
  %v89 = vld [vmem:[%s87] ss:$16 sm:%s88]
  %vm90 = vcmask 1043458
  %v91 = vsel %vm90, %v89, %v86
  %s92 = scalar_lea.vmem %s0, 12
  %s93 = smov 48
  %v94 = vld [vmem:[%s92] ss:$16 sm:%s93]
  %vm95 = vcmask 1045508
  %v96 = vsel %vm95, %v94, %v91
  %s97 = scalar_lea.vmem %s0, 12
  %s98 = smov 192
  %v99 = vld [vmem:[%s97] ss:$16 sm:%s98]
  %vm100 = vcmask 1047558
  %v101 = vsel %vm100, %v99, %v96
  %102 = vrot.lane.b32.xlu0 %v101, 96
  %v103 = vpop.permute.xlu0 %102
  %vm104 = vcmask 851712
  %105 = vst.msk [vmem:[%s1] sm:$0xff] %vm104, %v103
  %s106 = scalar_lea.vmem %s0, 11
  %s107 = smov 3
  %v108 = vld [vmem:[%s106] ss:$16 sm:%s107]
  %s109 = scalar_lea.vmem %s0, 11
  %s110 = smov 12
  %v111 = vld [vmem:[%s109] ss:$16 sm:%s110]
  %vm112 = vcmask 1043458
  %v113 = vsel %vm112, %v111, %v108
  %s114 = scalar_lea.vmem %s0, 11
  %s115 = smov 48
  %v116 = vld [vmem:[%s114] ss:$16 sm:%s115]
  %vm117 = vcmask 1045508
  %v118 = vsel %vm117, %v116, %v113
  %s119 = scalar_lea.vmem %s0, 11
  %s120 = smov 192
  %v121 = vld [vmem:[%s119] ss:$16 sm:%s120]
  %vm122 = vcmask 1047558
  %v123 = vsel %vm122, %v121, %v118
  %124 = vrot.lane.b32.xlu0 %v123, 88
  %v125 = vpop.permute.xlu0 %124
  %vm126 = vcmask 786112
  %127 = vst.msk [vmem:[%s1] sm:$0xff] %vm126, %v125
  %s128 = scalar_lea.vmem %s0, 10
  %s129 = smov 3
  %v130 = vld [vmem:[%s128] ss:$16 sm:%s129]
  %s131 = scalar_lea.vmem %s0, 10
  %s132 = smov 12
  %v133 = vld [vmem:[%s131] ss:$16 sm:%s132]
  %vm134 = vcmask 1043458
  %v135 = vsel %vm134, %v133, %v130
  %s136 = scalar_lea.vmem %s0, 10
  %s137 = smov 48
  %v138 = vld [vmem:[%s136] ss:$16 sm:%s137]
  %vm139 = vcmask 1045508
  %v140 = vsel %vm139, %v138, %v135
  %s141 = scalar_lea.vmem %s0, 10
  %s142 = smov 192
  %v143 = vld [vmem:[%s141] ss:$16 sm:%s142]
  %vm144 = vcmask 1047558
  %v145 = vsel %vm144, %v143, %v140
  %146 = vrot.lane.b32.xlu0 %v145, 80
  %v147 = vpop.permute.xlu0 %146
  %vm148 = vcmask 720512
  %149 = vst.msk [vmem:[%s1] sm:$0xff] %vm148, %v147
  %s150 = scalar_lea.vmem %s0, 9
  %s151 = smov 3
  %v152 = vld [vmem:[%s150] ss:$16 sm:%s151]
  %s153 = scalar_lea.vmem %s0, 9
  %s154 = smov 12
  %v155 = vld [vmem:[%s153] ss:$16 sm:%s154]
  %vm156 = vcmask 1043458
  %v157 = vsel %vm156, %v155, %v152
  %s158 = scalar_lea.vmem %s0, 9
  %s159 = smov 48
  %v160 = vld [vmem:[%s158] ss:$16 sm:%s159]
  %vm161 = vcmask 1045508
  %v162 = vsel %vm161, %v160, %v157
  %s163 = scalar_lea.vmem %s0, 9
  %s164 = smov 192
  %v165 = vld [vmem:[%s163] ss:$16 sm:%s164]
  %vm166 = vcmask 1047558
  %v167 = vsel %vm166, %v165, %v162
  %168 = vrot.lane.b32.xlu0 %v167, 72
  %v169 = vpop.permute.xlu0 %168
  %vm170 = vcmask 654912
  %171 = vst.msk [vmem:[%s1] sm:$0xff] %vm170, %v169
  %s172 = scalar_lea.vmem %s0, 8
  %s173 = smov 3
  %v174 = vld [vmem:[%s172] ss:$16 sm:%s173]
  %s175 = scalar_lea.vmem %s0, 8
  %s176 = smov 12
  %v177 = vld [vmem:[%s175] ss:$16 sm:%s176]
  %vm178 = vcmask 1043458
  %v179 = vsel %vm178, %v177, %v174
  %s180 = scalar_lea.vmem %s0, 8
  %s181 = smov 48
  %v182 = vld [vmem:[%s180] ss:$16 sm:%s181]
  %vm183 = vcmask 1045508
  %v184 = vsel %vm183, %v182, %v179
  %s185 = scalar_lea.vmem %s0, 8
  %s186 = smov 192
  %v187 = vld [vmem:[%s185] ss:$16 sm:%s186]
  %vm188 = vcmask 1047558
  %v189 = vsel %vm188, %v187, %v184
  %190 = vrot.lane.b32.xlu0 %v189, 64
  %v191 = vpop.permute.xlu0 %190
  %vm192 = vcmask 589312
  %193 = vst.msk [vmem:[%s1] sm:$0xff] %vm192, %v191
  %s194 = scalar_lea.vmem %s0, 7
  %s195 = smov 3
  %v196 = vld [vmem:[%s194] ss:$16 sm:%s195]
  %s197 = scalar_lea.vmem %s0, 7
  %s198 = smov 12
  %v199 = vld [vmem:[%s197] ss:$16 sm:%s198]
  %vm200 = vcmask 1043458
  %v201 = vsel %vm200, %v199, %v196
  %s202 = scalar_lea.vmem %s0, 7
  %s203 = smov 48
  %v204 = vld [vmem:[%s202] ss:$16 sm:%s203]
  %vm205 = vcmask 1045508
  %v206 = vsel %vm205, %v204, %v201
  %s207 = scalar_lea.vmem %s0, 7
  %s208 = smov 192
  %v209 = vld [vmem:[%s207] ss:$16 sm:%s208]
  %vm210 = vcmask 1047558
  %v211 = vsel %vm210, %v209, %v206
  %212 = vrot.lane.b32.xlu0 %v211, 56
  %v213 = vpop.permute.xlu0 %212
  %vm214 = vcmask 523712
  %215 = vst.msk [vmem:[%s1] sm:$0xff] %vm214, %v213
  %s216 = scalar_lea.vmem %s0, 6
  %s217 = smov 3
  %v218 = vld [vmem:[%s216] ss:$16 sm:%s217]
  %s219 = scalar_lea.vmem %s0, 6
  %s220 = smov 12
  %v221 = vld [vmem:[%s219] ss:$16 sm:%s220]
  %vm222 = vcmask 1043458
  %v223 = vsel %vm222, %v221, %v218
  %s224 = scalar_lea.vmem %s0, 6
  %s225 = smov 48
  %v226 = vld [vmem:[%s224] ss:$16 sm:%s225]
  %vm227 = vcmask 1045508
  %v228 = vsel %vm227, %v226, %v223
  %s229 = scalar_lea.vmem %s0, 6
  %s230 = smov 192
  %v231 = vld [vmem:[%s229] ss:$16 sm:%s230]
  %vm232 = vcmask 1047558
  %v233 = vsel %vm232, %v231, %v228
  %234 = vrot.lane.b32.xlu0 %v233, 48
  %v235 = vpop.permute.xlu0 %234
  %vm236 = vcmask 458112
  %237 = vst.msk [vmem:[%s1] sm:$0xff] %vm236, %v235
  %s238 = scalar_lea.vmem %s0, 5
  %s239 = smov 3
  %v240 = vld [vmem:[%s238] ss:$16 sm:%s239]
  %s241 = scalar_lea.vmem %s0, 5
  %s242 = smov 12
  %v243 = vld [vmem:[%s241] ss:$16 sm:%s242]
  %vm244 = vcmask 1043458
  %v245 = vsel %vm244, %v243, %v240
  %s246 = scalar_lea.vmem %s0, 5
  %s247 = smov 48
  %v248 = vld [vmem:[%s246] ss:$16 sm:%s247]
  %vm249 = vcmask 1045508
  %v250 = vsel %vm249, %v248, %v245
  %s251 = scalar_lea.vmem %s0, 5
  %s252 = smov 192
  %v253 = vld [vmem:[%s251] ss:$16 sm:%s252]
  %vm254 = vcmask 1047558
  %v255 = vsel %vm254, %v253, %v250
  %256 = vrot.lane.b32.xlu0 %v255, 40
  %v257 = vpop.permute.xlu0 %256
  %vm258 = vcmask 392512
  %259 = vst.msk [vmem:[%s1] sm:$0xff] %vm258, %v257
  %s260 = scalar_lea.vmem %s0, 4
  %s261 = smov 3
  %v262 = vld [vmem:[%s260] ss:$16 sm:%s261]
  %s263 = scalar_lea.vmem %s0, 4
  %s264 = smov 12
  %v265 = vld [vmem:[%s263] ss:$16 sm:%s264]
  %vm266 = vcmask 1043458
  %v267 = vsel %vm266, %v265, %v262
  %s268 = scalar_lea.vmem %s0, 4
  %s269 = smov 48
  %v270 = vld [vmem:[%s268] ss:$16 sm:%s269]
  %vm271 = vcmask 1045508
  %v272 = vsel %vm271, %v270, %v267
  %s273 = scalar_lea.vmem %s0, 4
  %s274 = smov 192
  %v275 = vld [vmem:[%s273] ss:$16 sm:%s274]
  %vm276 = vcmask 1047558
  %v277 = vsel %vm276, %v275, %v272
  %278 = vrot.lane.b32.xlu0 %v277, 32
  %v279 = vpop.permute.xlu0 %278
  %vm280 = vcmask 326912
  %281 = vst.msk [vmem:[%s1] sm:$0xff] %vm280, %v279
  %s282 = scalar_lea.vmem %s0, 3
  %s283 = smov 3
  %v284 = vld [vmem:[%s282] ss:$16 sm:%s283]
  %s285 = scalar_lea.vmem %s0, 3
  %s286 = smov 12
  %v287 = vld [vmem:[%s285] ss:$16 sm:%s286]
  %vm288 = vcmask 1043458
  %v289 = vsel %vm288, %v287, %v284
  %s290 = scalar_lea.vmem %s0, 3
  %s291 = smov 48
  %v292 = vld [vmem:[%s290] ss:$16 sm:%s291]
  %vm293 = vcmask 1045508
  %v294 = vsel %vm293, %v292, %v289
  %s295 = scalar_lea.vmem %s0, 3
  %s296 = smov 192
  %v297 = vld [vmem:[%s295] ss:$16 sm:%s296]
  %vm298 = vcmask 1047558
  %v299 = vsel %vm298, %v297, %v294
  %300 = vrot.lane.b32.xlu0 %v299, 24
  %v301 = vpop.permute.xlu0 %300
  %vm302 = vcmask 261312
  %303 = vst.msk [vmem:[%s1] sm:$0xff] %vm302, %v301
  %s304 = scalar_lea.vmem %s0, 2
  %s305 = smov 3
  %v306 = vld [vmem:[%s304] ss:$16 sm:%s305]
  %s307 = scalar_lea.vmem %s0, 2
  %s308 = smov 12
  %v309 = vld [vmem:[%s307] ss:$16 sm:%s308]
  %vm310 = vcmask 1043458
  %v311 = vsel %vm310, %v309, %v306
  %s312 = scalar_lea.vmem %s0, 2
  %s313 = smov 48
  %v314 = vld [vmem:[%s312] ss:$16 sm:%s313]
  %vm315 = vcmask 1045508
  %v316 = vsel %vm315, %v314, %v311
  %s317 = scalar_lea.vmem %s0, 2
  %s318 = smov 192
  %v319 = vld [vmem:[%s317] ss:$16 sm:%s318]
  %vm320 = vcmask 1047558
  %v321 = vsel %vm320, %v319, %v316
  %322 = vrot.lane.b32.xlu0 %v321, 16
  %v323 = vpop.permute.xlu0 %322
  %vm324 = vcmask 195712
  %325 = vst.msk [vmem:[%s1] sm:$0xff] %vm324, %v323
  %s326 = scalar_lea.vmem %s0, 1
  %s327 = smov 3
  %v328 = vld [vmem:[%s326] ss:$16 sm:%s327]
  %s329 = scalar_lea.vmem %s0, 1
  %s330 = smov 12
  %v331 = vld [vmem:[%s329] ss:$16 sm:%s330]
  %vm332 = vcmask 1043458
  %v333 = vsel %vm332, %v331, %v328
  %s334 = scalar_lea.vmem %s0, 1
  %s335 = smov 48
  %v336 = vld [vmem:[%s334] ss:$16 sm:%s335]
  %vm337 = vcmask 1045508
  %v338 = vsel %vm337, %v336, %v333
  %s339 = scalar_lea.vmem %s0, 1
  %s340 = smov 192
  %v341 = vld [vmem:[%s339] ss:$16 sm:%s340]
  %vm342 = vcmask 1047558
  %v343 = vsel %vm342, %v341, %v338
  %344 = vrot.lane.b32.xlu0 %v343, 8
  %v345 = vpop.permute.xlu0 %344
  %vm346 = vcmask 130112
  %347 = vst.msk [vmem:[%s1] sm:$0xff] %vm346, %v345

// kernel: conv_bn_silu.1
$region0: #{conv_bn_silu.1}
  #allocation0 [shape = 'u32[]', space=smem, size = 0x4, offset = 0x4, fixed_abs, tag = 'smem constant byte address 0x4 - core index']
  #allocation1 [shape = 'u32[144,128]{1,0:T(1,128)}', space=vmem, size = 0x12000, scoped, tag = 'internal scratch']
  %s0 = inlined_call_operand.vmem [shape: bf16[36,128], index: 0, kind: input, shape index: {}]
  %s1 = inlined_call_operand.vmem [shape: bf16[3,128,128], index: 1, kind: input, shape index: {}]
  %s2 = inlined_call_operand.vmem [shape: f32[1,8], index: 2, kind: input, shape index: {}]
  %s3 = inlined_call_operand.vmem [shape: f32[1,8], index: 3, kind: input, shape index: {}]
  %s4 = inlined_call_operand.vmem [shape: f32[128,8], index: 4, kind: input, shape index: {}]
  %s5 = inlined_call_operand.vmem [shape: f32[8,128], index: 5, kind: input, shape index: {}]
  %s6 = inlined_call_operand.vmem [shape: f32[32,128], index: 6, kind: output, shape index: {}]
  %s7 = sld [smem:[#allocation0]]
  $region34: #{conv_bn_silu.1} parent=0
    _
  %s9 = ssub.s32 1, %s7
  %s10 = scalar_select 0, %s9, %s7
  // Predicated region
  $region2: #{conv_bn_silu.1} parent=0 // pred_check
    _
  $region3: #{conv_bn_silu.1} parent=0 // pred_check_branch
    %12 = sbr.rel (0) target = $region5
  $region4: #{conv_bn_silu.1} parent=0 // pred_region
    _
  $region5: #{conv_bn_silu.1} parent=0 // pred_fallthru
    _
  // Predicated region
  $region6: #{conv_bn_silu.1} parent=0 // pred_check
    _
  $region7: #{conv_bn_silu.1} parent=0 // pred_check_branch
    %14 = sbr.rel (0) target = $region9
  $region8: #{conv_bn_silu.1} parent=0 // pred_region
    _
  $region9: #{conv_bn_silu.1} parent=0 // pred_fallthru
    _
  // Predicated region
  $region10: #{conv_bn_silu.1} parent=0 // pred_check
    _
  $region11: #{conv_bn_silu.1} parent=0 // pred_check_branch
    %16 = sbr.rel (0) target = $region13
  $region12: #{conv_bn_silu.1} parent=0 // pred_region
    _
  $region13: #{conv_bn_silu.1} parent=0 // pred_fallthru
    _
  // Predicated region
  $region14: #{conv_bn_silu.1} parent=0 // pred_check
    _
  $region15: #{conv_bn_silu.1} parent=0 // pred_check_branch
    %18 = sbr.rel (0) target = $region17
  $region16: #{conv_bn_silu.1} parent=0 // pred_region
    _
  $region17: #{conv_bn_silu.1} parent=0 // pred_fallthru
    _
  // Predicated region
  $region18: #{conv_bn_silu.1} parent=0 // pred_check
    _
  $region19: #{conv_bn_silu.1} parent=0 // pred_check_branch
    %20 = sbr.rel (0) target = $region21
  $region20: #{conv_bn_silu.1} parent=0 // pred_region
    _
  $region21: #{conv_bn_silu.1} parent=0 // pred_fallthru
    _
  // Predicated region
  $region22: #{conv_bn_silu.1} parent=0 // pred_check
    _
  $region23: #{conv_bn_silu.1} parent=0 // pred_check_branch
    %22 = sbr.rel (0) target = $region25
  $region24: #{conv_bn_silu.1} parent=0 // pred_region
    _
  $region25: #{conv_bn_silu.1} parent=0 // pred_fallthru
    _
  %v24 = vld [vmem:[%s0] sm:$0xf]
  %v25 = vld [vmem:[%s0 + $0x4] sm:$0xf]
  %v26 = vld [vmem:[%s0 + $0x8] sm:$0xf]
  %v27 = vld [vmem:[%s0 + $0xc] sm:$0xf]
  %v28 = vld [vmem:[%s0 + $0x10] sm:$0x3]
  %v29 = vld [vmem:[%s1] sm:$0xf]
  %v30 = vld [vmem:[%s1 + $0x4] sm:$0xf]
  %v31 = vld [vmem:[%s1 + $0x8] sm:$0xf]
  %v32 = vld [vmem:[%s1 + $0xc] sm:$0xf]
  %v33 = vld [vmem:[%s1 + $0x10] sm:$0xf]
  %v34 = vld [vmem:[%s1 + $0x14] sm:$0xf]
  %v35 = vld [vmem:[%s1 + $0x18] sm:$0xf]
  %v36 = vld [vmem:[%s1 + $0x1c] sm:$0xf]
  %v37 = vld [vmem:[%s1 + $0x20] sm:$0xf]
  %v38 = vld [vmem:[%s1 + $0x24] sm:$0xf]
  %v39 = vld [vmem:[%s1 + $0x28] sm:$0xf]
  %v40 = vld [vmem:[%s1 + $0x2c] sm:$0xf]
  %v41 = vld [vmem:[%s1 + $0x30] sm:$0xf]
  %v42 = vld [vmem:[%s1 + $0x34] sm:$0xf]
  %v43 = vld [vmem:[%s1 + $0x38] sm:$0xf]
  %v44 = vld [vmem:[%s1 + $0x3c] sm:$0xf]
  %v50 = vunpack.c.l.b16 %v24
  %v51 = vunpack.c.l.b16 %v25
  %v52 = vunpack.c.l.b16 %v26
  %v53 = vunpack.c.l.b16 %v27
  %v54 = vunpack.c.l.b16 %v28
  %v55 = vpack.c.b16 %v51, %v50
  %v56 = vpack.c.b16 %v53, %v52
  %v57 = vpack.c.b16 %v54, %v54
  %v77 = vunpack.c.l.b16 %v29
  %v78 = vunpack.c.l.b16 %v30
  %v79 = vunpack.c.l.b16 %v31
  %v80 = vunpack.c.l.b16 %v32
  %v81 = vunpack.c.l.b16 %v33
  %v82 = vunpack.c.l.b16 %v34
  %v83 = vunpack.c.l.b16 %v35
  %v84 = vunpack.c.l.b16 %v36
  %v85 = vunpack.c.l.b16 %v37
  %v86 = vunpack.c.l.b16 %v38
  %v87 = vunpack.c.l.b16 %v39
  %v88 = vunpack.c.l.b16 %v40
  %v89 = vunpack.c.l.b16 %v41
  %v90 = vunpack.c.l.b16 %v42
  %v91 = vunpack.c.l.b16 %v43
  %v92 = vunpack.c.l.b16 %v44
  %v93 = vpack.c.b16 %v78, %v77
  %v94 = vpack.c.b16 %v80, %v79
  %v95 = vpack.c.b16 %v82, %v81
  %v96 = vpack.c.b16 %v84, %v83
  %v97 = vpack.c.b16 %v86, %v85
  %v98 = vpack.c.b16 %v88, %v87
  %v99 = vpack.c.b16 %v90, %v89
  %v100 = vpack.c.b16 %v92, %v91
  %109 = vmatprep.subr.bf16.mxu0 0
  %110 = vmatpush1.bf16.msra.mxu0 %v100
  %111 = vmatprep.subr.bf16.mxu0 0
  %112 = vmatpush1.bf16.msra.mxu0 %v99
  %113 = vmatprep.subr.bf16.mxu0 0
  %114 = vmatpush1.bf16.msra.mxu0 %v98
  %115 = vmatprep.subr.bf16.mxu0 0
  %116 = vmatpush1.bf16.msra.mxu0 %v97
  %117 = vmatprep.subr.bf16.mxu0 0
  %118 = vmatpush1.bf16.msra.mxu0 %v96
  %119 = vmatprep.subr.bf16.mxu0 0
  %120 = vmatpush1.bf16.msra.mxu0 %v95
  %121 = vmatprep.subr.bf16.mxu0 0
  %122 = vmatpush1.bf16.msra.mxu0 %v94
  %123 = vmatprep.subr.bf16.mxu0 0
  %124 = vmatpush1.bf16.msra.mxu0 %v93
  %125 = vmatprep.subr.bf16.mxu0 0
  %126 = vmatpush2.bf16.msra.mxu0 0
  %127 = vmatprep.subr.bf16.mxu0 0
  %128 = vmatpush2.bf16.msra.mxu0 0
  %129 = vmatprep.subr.bf16.mxu0 0
  %130 = vmatpush2.bf16.msra.mxu0 0
  %131 = vmatprep.subr.bf16.mxu0 0
  %132 = vmatpush2.bf16.msra.mxu0 0
  %133 = vmatprep.subr.bf16.mxu0 0
  %134 = vmatpush2.bf16.msra.mxu0 0
  %135 = vmatprep.subr.bf16.mxu0 0
  %136 = vmatpush2.bf16.msra.mxu0 0
  %137 = vmatprep.subr.bf16.mxu0 0
  %138 = vmatpush2.bf16.msra.mxu0 0
  %139 = vmatprep.subr.bf16.mxu0 0
  %140 = vmatpush2.bf16.msra.mxu0 0
  %141 = vmatprep.mubr.bf16.mxu0 0
  %142 = vmatmul.mubr.bf16.gmra.mxu0 %v55
  %v143 = vpop.f32.mrf.mxu0
  %v144 = vadd.f32 0.0, %v143
  %v145 = vpop.f32.mrf.mxu0
  %v146 = vpop.f32.mrf.mxu0
  %v147 = vadd.f32 0.0, %v146
  %v148 = vpop.f32.mrf.mxu0
  %149 = vmatprep.mubr.bf16.mxu0 0
  %150 = vmatmul.mubr.bf16.gmra.mxu0 %v56
  %v151 = vpop.f32.mrf.mxu0
  %v152 = vadd.f32 0.0, %v151
  %v153 = vpop.f32.mrf.mxu0
  %v154 = vpop.f32.mrf.mxu0
  %v155 = vadd.f32 0.0, %v154
  %v156 = vpop.f32.mrf.mxu0
  %157 = vmatprep.mubr.bf16.mxu0 0
  %158 = vmatmul.mubr.bf16.gmra.mxu0 %v57
  %v159 = vpop.f32.mrf.mxu0
  %v160 = vadd.f32 0.0, %v159
  %v161 = vpop.f32.mrf.mxu0
  %v162 = vpop.f32.mrf.mxu0
  %v163 = vpop.f32.mrf.mxu0
  %164 = vdwg.mxu0
  %s165 = scalar_lea.vmem %s1, 64
  %v166 = vld [vmem:[%s165] sm:$0xf]
  %v167 = vld [vmem:[%s165 + $0x4] sm:$0xf]
  %v168 = vld [vmem:[%s165 + $0x8] sm:$0xf]
  %v169 = vld [vmem:[%s165 + $0xc] sm:$0xf]
  %v170 = vld [vmem:[%s165 + $0x10] sm:$0xf]
  %v171 = vld [vmem:[%s165 + $0x14] sm:$0xf]
  %v172 = vld [vmem:[%s165 + $0x18] sm:$0xf]
  %v173 = vld [vmem:[%s165 + $0x1c] sm:$0xf]
  %v174 = vld [vmem:[%s165 + $0x20] sm:$0xf]
  %v175 = vld [vmem:[%s165 + $0x24] sm:$0xf]
  %v176 = vld [vmem:[%s165 + $0x28] sm:$0xf]
  %v177 = vld [vmem:[%s165 + $0x2c] sm:$0xf]
  %v178 = vld [vmem:[%s165 + $0x30] sm:$0xf]
  %v179 = vld [vmem:[%s165 + $0x34] sm:$0xf]
  %v180 = vld [vmem:[%s165 + $0x38] sm:$0xf]
  %v181 = vld [vmem:[%s165 + $0x3c] sm:$0xf]
  %v198 = vunpack.c.l.b16 %v166
  %v199 = vunpack.c.l.b16 %v167
  %v200 = vunpack.c.l.b16 %v168
  %v201 = vunpack.c.l.b16 %v169
  %v202 = vunpack.c.l.b16 %v170
  %v203 = vunpack.c.l.b16 %v171
  %v204 = vunpack.c.l.b16 %v172
  %v205 = vunpack.c.l.b16 %v173
  %v206 = vunpack.c.l.b16 %v174
  %v207 = vunpack.c.l.b16 %v175
  %v208 = vunpack.c.l.b16 %v176
  %v209 = vunpack.c.l.b16 %v177
  %v210 = vunpack.c.l.b16 %v178
  %v211 = vunpack.c.l.b16 %v179
  %v212 = vunpack.c.l.b16 %v180
  %v213 = vunpack.c.l.b16 %v181
  %v214 = vpack.c.b16 %v199, %v198
  %v215 = vpack.c.b16 %v201, %v200
  %v216 = vpack.c.b16 %v203, %v202
  %v217 = vpack.c.b16 %v205, %v204
  %v218 = vpack.c.b16 %v207, %v206
  %v219 = vpack.c.b16 %v209, %v208
  %v220 = vpack.c.b16 %v211, %v210
  %v221 = vpack.c.b16 %v213, %v212
  %230 = vmatprep.subr.bf16.mxu0 0
  %231 = vmatpush1.bf16.msra.mxu0 %v221
  %232 = vmatprep.subr.bf16.mxu0 0
  %233 = vmatpush1.bf16.msra.mxu0 %v220
  %234 = vmatprep.subr.bf16.mxu0 0
  %235 = vmatpush1.bf16.msra.mxu0 %v219
  %236 = vmatprep.subr.bf16.mxu0 0
  %237 = vmatpush1.bf16.msra.mxu0 %v218
  %238 = vmatprep.subr.bf16.mxu0 0
  %239 = vmatpush1.bf16.msra.mxu0 %v217
  %240 = vmatprep.subr.bf16.mxu0 0
  %241 = vmatpush1.bf16.msra.mxu0 %v216
  %242 = vmatprep.subr.bf16.mxu0 0
  %243 = vmatpush1.bf16.msra.mxu0 %v215
  %244 = vmatprep.subr.bf16.mxu0 0
  %245 = vmatpush1.bf16.msra.mxu0 %v214
  %246 = vmatprep.subr.bf16.mxu0 0
  %247 = vmatpush2.bf16.msra.mxu0 0
  %248 = vmatprep.subr.bf16.mxu0 0
  %249 = vmatpush2.bf16.msra.mxu0 0
  %250 = vmatprep.subr.bf16.mxu0 0
  %251 = vmatpush2.bf16.msra.mxu0 0
  %252 = vmatprep.subr.bf16.mxu0 0
  %253 = vmatpush2.bf16.msra.mxu0 0
  %254 = vmatprep.subr.bf16.mxu0 0
  %255 = vmatpush2.bf16.msra.mxu0 0
  %256 = vmatprep.subr.bf16.mxu0 0
  %257 = vmatpush2.bf16.msra.mxu0 0
  %258 = vmatprep.subr.bf16.mxu0 0
  %259 = vmatpush2.bf16.msra.mxu0 0
  %260 = vmatprep.subr.bf16.mxu0 0
  %261 = vmatpush2.bf16.msra.mxu0 0
  %262 = vmatprep.mubr.bf16.mxu0 0
  %263 = vmatmul.mubr.bf16.gmra.mxu0 %v55
  %v264 = vpop.f32.mrf.mxu0
  %v265 = vadd.f32 0.0, %v264
  %v266 = vpop.f32.mrf.mxu0
  %v267 = vpop.f32.mrf.mxu0
  %v268 = vadd.f32 0.0, %v267
  %v269 = vpop.f32.mrf.mxu0
  %270 = vmatprep.mubr.bf16.mxu0 0
  %271 = vmatmul.mubr.bf16.gmra.mxu0 %v56
  %v272 = vpop.f32.mrf.mxu0
  %v273 = vadd.f32 0.0, %v272
  %v274 = vpop.f32.mrf.mxu0
  %v275 = vpop.f32.mrf.mxu0
  %v276 = vadd.f32 0.0, %v275
  %v277 = vpop.f32.mrf.mxu0
  %278 = vmatprep.mubr.bf16.mxu0 0
  %279 = vmatmul.mubr.bf16.gmra.mxu0 %v57
  %v280 = vpop.f32.mrf.mxu0
  %v281 = vadd.f32 0.0, %v280
  %v282 = vpop.f32.mrf.mxu0
  %v283 = vpop.f32.mrf.mxu0
  %v284 = vpop.f32.mrf.mxu0
  %285 = vdwg.mxu0
  %s286 = scalar_lea.vmem %s1, 128
  %v287 = vld [vmem:[%s286] sm:$0xf]
  %v288 = vld [vmem:[%s286 + $0x4] sm:$0xf]
  %v289 = vld [vmem:[%s286 + $0x8] sm:$0xf]
  %v290 = vld [vmem:[%s286 + $0xc] sm:$0xf]
  %v291 = vld [vmem:[%s286 + $0x10] sm:$0xf]
  %v292 = vld [vmem:[%s286 + $0x14] sm:$0xf]
  %v293 = vld [vmem:[%s286 + $0x18] sm:$0xf]
  %v294 = vld [vmem:[%s286 + $0x1c] sm:$0xf]
  %v295 = vld [vmem:[%s286 + $0x20] sm:$0xf]
  %v296 = vld [vmem:[%s286 + $0x24] sm:$0xf]
  %v297 = vld [vmem:[%s286 + $0x28] sm:$0xf]
  %v298 = vld [vmem:[%s286 + $0x2c] sm:$0xf]
  %v299 = vld [vmem:[%s286 + $0x30] sm:$0xf]
  %v300 = vld [vmem:[%s286 + $0x34] sm:$0xf]
  %v301 = vld [vmem:[%s286 + $0x38] sm:$0xf]
  %v302 = vld [vmem:[%s286 + $0x3c] sm:$0xf]
  %v319 = vunpack.c.l.b16 %v287
  %v320 = vunpack.c.l.b16 %v288
  %v321 = vunpack.c.l.b16 %v289
  %v322 = vunpack.c.l.b16 %v290
  %v323 = vunpack.c.l.b16 %v291
  %v324 = vunpack.c.l.b16 %v292
  %v325 = vunpack.c.l.b16 %v293
  %v326 = vunpack.c.l.b16 %v294
  %v327 = vunpack.c.l.b16 %v295
  %v328 = vunpack.c.l.b16 %v296
  %v329 = vunpack.c.l.b16 %v297
  %v330 = vunpack.c.l.b16 %v298
  %v331 = vunpack.c.l.b16 %v299
  %v332 = vunpack.c.l.b16 %v300
  %v333 = vunpack.c.l.b16 %v301
  %v334 = vunpack.c.l.b16 %v302
  %v335 = vpack.c.b16 %v320, %v319
  %v336 = vpack.c.b16 %v322, %v321
  %v337 = vpack.c.b16 %v324, %v323
  %v338 = vpack.c.b16 %v326, %v325
  %v339 = vpack.c.b16 %v328, %v327
  %v340 = vpack.c.b16 %v330, %v329
  %v341 = vpack.c.b16 %v332, %v331
  %v342 = vpack.c.b16 %v334, %v333
  %351 = vmatprep.subr.bf16.mxu0 0
  %352 = vmatpush1.bf16.msra.mxu0 %v342
  %353 = vmatprep.subr.bf16.mxu0 0
  %354 = vmatpush1.bf16.msra.mxu0 %v341
  %355 = vmatprep.subr.bf16.mxu0 0
  %356 = vmatpush1.bf16.msra.mxu0 %v340
  %357 = vmatprep.subr.bf16.mxu0 0
  %358 = vmatpush1.bf16.msra.mxu0 %v339
  %359 = vmatprep.subr.bf16.mxu0 0
  %360 = vmatpush1.bf16.msra.mxu0 %v338
  %361 = vmatprep.subr.bf16.mxu0 0
  %362 = vmatpush1.bf16.msra.mxu0 %v337
  %363 = vmatprep.subr.bf16.mxu0 0
  %364 = vmatpush1.bf16.msra.mxu0 %v336
  %365 = vmatprep.subr.bf16.mxu0 0
  %366 = vmatpush1.bf16.msra.mxu0 %v335
  %367 = vmatprep.subr.bf16.mxu0 0
  %368 = vmatpush2.bf16.msra.mxu0 0
  %369 = vmatprep.subr.bf16.mxu0 0
  %370 = vmatpush2.bf16.msra.mxu0 0
  %371 = vmatprep.subr.bf16.mxu0 0
  %372 = vmatpush2.bf16.msra.mxu0 0
  %373 = vmatprep.subr.bf16.mxu0 0
  %374 = vmatpush2.bf16.msra.mxu0 0
  %375 = vmatprep.subr.bf16.mxu0 0
  %376 = vmatpush2.bf16.msra.mxu0 0
  %377 = vmatprep.subr.bf16.mxu0 0
  %378 = vmatpush2.bf16.msra.mxu0 0
  %379 = vmatprep.subr.bf16.mxu0 0
  %380 = vmatpush2.bf16.msra.mxu0 0
  %381 = vmatprep.subr.bf16.mxu0 0
  %382 = vmatpush2.bf16.msra.mxu0 0
  %383 = vmatprep.mubr.bf16.mxu0 0
  %384 = vmatmul.mubr.bf16.gmra.mxu0 %v55
  %v385 = vpop.f32.mrf.mxu0
  %v386 = vadd.f32 0.0, %v385
  %v387 = vpop.f32.mrf.mxu0
  %v388 = vpop.f32.mrf.mxu0
  %v389 = vadd.f32 0.0, %v388
  %v390 = vpop.f32.mrf.mxu0
  %391 = vmatprep.mubr.bf16.mxu0 0
  %392 = vmatmul.mubr.bf16.gmra.mxu0 %v56
  %v393 = vpop.f32.mrf.mxu0
  %v394 = vadd.f32 0.0, %v393
  %v395 = vpop.f32.mrf.mxu0
  %v396 = vpop.f32.mrf.mxu0
  %v397 = vadd.f32 0.0, %v396
  %v398 = vpop.f32.mrf.mxu0
  %399 = vmatprep.mubr.bf16.mxu0 0
  %400 = vmatmul.mubr.bf16.gmra.mxu0 %v57
  %v401 = vpop.f32.mrf.mxu0
  %v402 = vadd.f32 0.0, %v401
  %v403 = vpop.f32.mrf.mxu0
  %v404 = vpop.f32.mrf.mxu0
  %v405 = vpop.f32.mrf.mxu0
  %406 = vdwg.mxu0
  %vm410 = vcmask 1046528
  %v411 = vrot.slane %v265, 1
  %v412 = vrot.slane %v268, 1
  %v413 = vsel %vm410, %v411, %v412
  %v414 = vrot.slane %v273, 1
  %v415 = vsel %vm410, %v412, %v414
  %v418 = vadd.f32 %v144, %v413
  %v419 = vadd.f32 %v147, %v415
  %vm423 = vcmask 1045504
  %v424 = vrot.slane %v386, 2
  %v425 = vrot.slane %v389, 2
  %v426 = vsel %vm423, %v424, %v425
  %v427 = vrot.slane %v394, 2
  %v428 = vsel %vm423, %v425, %v427
  %v431 = vadd.f32 %v418, %v426
  %v432 = vadd.f32 %v419, %v428
  %v433 = vadd.f32 %v431, %v432
  %v434 = vrot.slane %v433, 4
  %v435 = vadd.f32 %v433, %v434
  %v436 = vrot.slane %v435, 2
  %v437 = vadd.f32 %v435, %v436
  %v438 = vrot.slane %v437, 1
  %v439 = vadd.f32 %v437, %v438
  %v440 = vadd.f32 %v439, 0.0
  %v441 = vmul.f32 %v431, %v431
  %v442 = vmul.f32 %v432, %v432
  %v443 = vadd.f32 %v441, %v442
  %v444 = vrot.slane %v443, 4
  %v445 = vadd.f32 %v443, %v444
  %v446 = vrot.slane %v445, 2
  %v447 = vadd.f32 %v445, %v446
  %v448 = vrot.slane %v447, 1
  %v449 = vadd.f32 %v447, %v448
  %v450 = vadd.f32 %v449, 0.0
  %451 = vst [vmem:[%s6] sm:$0xff] %v431
  %452 = vst [vmem:[%s6 + $0x8] sm:$0xff] %v432
  %v455 = vrot.slane %v276, 1
  %v456 = vsel %vm410, %v414, %v455
  %v457 = vrot.slane %v281, 1
  %v458 = vsel %vm410, %v455, %v457
  %v462 = vadd.f32 %v152, %v456
  %v463 = vadd.f32 %v155, %v458
  %v464 = vadd.f32 %v160, %v457
  %v467 = vrot.slane %v397, 2
  %v468 = vsel %vm423, %v427, %v467
  %v469 = vrot.slane %v402, 2
  %v470 = vsel %vm423, %v467, %v469
  %v474 = vadd.f32 %v462, %v468
  %v475 = vadd.f32 %v463, %v470
  %v476 = vadd.f32 %v464, %v469
  %v480 = vrot.slane %v474, 2
  %v481 = vrot.slane %v475, 2
  %v482 = vsel %vm423, %v480, %v481
  %v483 = vrot.slane %v476, 2
  %v484 = vsel %vm423, %v481, %v483
  %v487 = vadd.f32 %v482, %v484
  %v488 = vrot.slane %v487, 4
  %v489 = vadd.f32 %v487, %v488
  %v490 = vrot.slane %v489, 2
  %v491 = vadd.f32 %v489, %v490
  %v492 = vrot.slane %v491, 1
  %v493 = vadd.f32 %v491, %v492
  %v494 = vadd.f32 %v440, %v493
  %v495 = vmul.f32 %v474, %v474
  %v496 = vmul.f32 %v475, %v475
  %v497 = vmul.f32 %v476, %v476
  %v501 = vrot.slane %v495, 2
  %v502 = vrot.slane %v496, 2
  %v503 = vsel %vm423, %v501, %v502
  %v504 = vrot.slane %v497, 2
  %v505 = vsel %vm423, %v502, %v504
  %v508 = vadd.f32 %v503, %v505
  %v509 = vrot.slane %v508, 4
  %v510 = vadd.f32 %v508, %v509
  %v511 = vrot.slane %v510, 2
  %v512 = vadd.f32 %v510, %v511
  %v513 = vrot.slane %v512, 1
  %v514 = vadd.f32 %v512, %v513
  %v515 = vadd.f32 %v450, %v514
  %516 = vst [vmem:[%s6 + $0xe] sm:$0xfc] %v474
  %517 = vst [vmem:[%s6 + $0x16] sm:$0xff] %v475
  %518 = vst [vmem:[%s6 + $0x1e] sm:$0x3] %v476
  %v519 = vld [vmem:[%s4] sm:$0xff]
  %v520 = vld [vmem:[%s4 + $0x8] sm:$0xff]
  %v521 = vld [vmem:[%s4 + $0x10] sm:$0xff]
  %v522 = vld [vmem:[%s4 + $0x18] sm:$0xff]
  %v523 = vld [vmem:[%s4 + $0x20] sm:$0xff]
  %v524 = vld [vmem:[%s4 + $0x28] sm:$0xff]
  %v525 = vld [vmem:[%s4 + $0x30] sm:$0xff]
  %v526 = vld [vmem:[%s4 + $0x38] sm:$0xff]
  %v527 = vld [vmem:[%s4 + $0x40] sm:$0xff]
  %v528 = vld [vmem:[%s4 + $0x48] sm:$0xff]
  %v529 = vld [vmem:[%s4 + $0x50] sm:$0xff]
  %v530 = vld [vmem:[%s4 + $0x58] sm:$0xff]
  %v531 = vld [vmem:[%s4 + $0x60] sm:$0xff]
  %v532 = vld [vmem:[%s4 + $0x68] sm:$0xff]
  %v533 = vld [vmem:[%s4 + $0x70] sm:$0xff]
  %v534 = vld [vmem:[%s4 + $0x78] sm:$0xff]
  %535 = vmatprep.subr.mxu0 0.0
  %536 = vmatpush1.msra.mxu0 %v534
  %537 = vmatprep.subr.mxu0 0.0
  %538 = vmatpush1.msra.mxu0 %v533
  %539 = vmatprep.subr.mxu0 0.0
  %540 = vmatpush1.msra.mxu0 %v532
  %541 = vmatprep.subr.mxu0 0.0
  %542 = vmatpush1.msra.mxu0 %v531
  %543 = vmatprep.subr.mxu0 0.0
  %544 = vmatpush1.msra.mxu0 %v530
  %545 = vmatprep.subr.mxu0 0.0
  %546 = vmatpush1.msra.mxu0 %v529
  %547 = vmatprep.subr.mxu0 0.0
  %548 = vmatpush1.msra.mxu0 %v528
  %549 = vmatprep.subr.mxu0 0.0
  %550 = vmatpush1.msra.mxu0 %v527
  %551 = vmatprep.subr.mxu0 0.0
  %552 = vmatpush1.msra.mxu0 %v526
  %553 = vmatprep.subr.mxu0 0.0
  %554 = vmatpush1.msra.mxu0 %v525
  %555 = vmatprep.subr.mxu0 0.0
  %556 = vmatpush1.msra.mxu0 %v524
  %557 = vmatprep.subr.mxu0 0.0
  %558 = vmatpush1.msra.mxu0 %v523
  %559 = vmatprep.subr.mxu0 0.0
  %560 = vmatpush1.msra.mxu0 %v522
  %561 = vmatprep.subr.mxu0 0.0
  %562 = vmatpush1.msra.mxu0 %v521
  %563 = vmatprep.subr.mxu0 0.0
  %564 = vmatpush1.msra.mxu0 %v520
  %565 = vmatprep.subr.mxu0 0.0
  %566 = vmatpush1.msra.mxu0 %v519
  %567 = vmatprep.subr.mxu0 0.0
  %568 = vmatpush2.msra.mxu0 0.0
  %569 = vmatprep.subr.mxu0 0.0
  %570 = vmatpush2.msra.mxu0 0.0
  %571 = vmatprep.subr.mxu0 0.0
  %572 = vmatpush2.msra.mxu0 0.0
  %573 = vmatprep.subr.mxu0 0.0
  %574 = vmatpush2.msra.mxu0 0.0
  %575 = vmatprep.subr.mxu0 0.0
  %576 = vmatpush2.msra.mxu0 0.0
  %577 = vmatprep.subr.mxu0 0.0
  %578 = vmatpush2.msra.mxu0 0.0
  %579 = vmatprep.subr.mxu0 0.0
  %580 = vmatpush2.msra.mxu0 0.0
  %581 = vmatprep.subr.mxu0 0.0
  %582 = vmatpush2.msra.mxu0 0.0
  %583 = vmatprep.subr.mxu0 0.0
  %584 = vmatpush2.msra.mxu0 0.0
  %585 = vmatprep.subr.mxu0 0.0
  %586 = vmatpush2.msra.mxu0 0.0
  %587 = vmatprep.subr.mxu0 0.0
  %588 = vmatpush2.msra.mxu0 0.0
  %589 = vmatprep.subr.mxu0 0.0
  %590 = vmatpush2.msra.mxu0 0.0
  %591 = vmatprep.subr.mxu0 0.0
  %592 = vmatpush2.msra.mxu0 0.0
  %593 = vmatprep.subr.mxu0 0.0
  %594 = vmatpush2.msra.mxu0 0.0
  %595 = vmatprep.subr.mxu0 0.0
  %596 = vmatpush2.msra.mxu0 0.0
  %597 = vmatprep.subr.mxu0 0.0
  %598 = vmatpush2.msra.mxu0 0.0
  %599 = vmatprep.mubr.f32.mxu0 0.0
  %600 = vmatmul.mubr.f32.gmra.mxu0 %v494
  %v601 = vpop.f32.mrf.mxu0
  %v602 = vadd.f32 0.0, %v601
  %v603 = vpop.f32.mrf.mxu0
  %604 = vdwg.mxu0
  %605 = vmatprep.subr.mxu0 0.0
  %606 = vmatpush1.msra.mxu0 %v534
  %607 = vmatprep.subr.mxu0 0.0
  %608 = vmatpush1.msra.mxu0 %v533
  %609 = vmatprep.subr.mxu0 0.0
  %610 = vmatpush1.msra.mxu0 %v532
  %611 = vmatprep.subr.mxu0 0.0
  %612 = vmatpush1.msra.mxu0 %v531
  %613 = vmatprep.subr.mxu0 0.0
  %614 = vmatpush1.msra.mxu0 %v530
  %615 = vmatprep.subr.mxu0 0.0
  %616 = vmatpush1.msra.mxu0 %v529
  %617 = vmatprep.subr.mxu0 0.0
  %618 = vmatpush1.msra.mxu0 %v528
  %619 = vmatprep.subr.mxu0 0.0
  %620 = vmatpush1.msra.mxu0 %v527
  %621 = vmatprep.subr.mxu0 0.0
  %622 = vmatpush1.msra.mxu0 %v526
  %623 = vmatprep.subr.mxu0 0.0
  %624 = vmatpush1.msra.mxu0 %v525
  %625 = vmatprep.subr.mxu0 0.0
  %626 = vmatpush1.msra.mxu0 %v524
  %627 = vmatprep.subr.mxu0 0.0
  %628 = vmatpush1.msra.mxu0 %v523
  %629 = vmatprep.subr.mxu0 0.0
  %630 = vmatpush1.msra.mxu0 %v522
  %631 = vmatprep.subr.mxu0 0.0
  %632 = vmatpush1.msra.mxu0 %v521
  %633 = vmatprep.subr.mxu0 0.0
  %634 = vmatpush1.msra.mxu0 %v520
  %635 = vmatprep.subr.mxu0 0.0
  %636 = vmatpush1.msra.mxu0 %v519
  %637 = vmatprep.subr.mxu0 0.0
  %638 = vmatpush2.msra.mxu0 0.0
  %639 = vmatprep.subr.mxu0 0.0
  %640 = vmatpush2.msra.mxu0 0.0
  %641 = vmatprep.subr.mxu0 0.0
  %642 = vmatpush2.msra.mxu0 0.0
  %643 = vmatprep.subr.mxu0 0.0
  %644 = vmatpush2.msra.mxu0 0.0
  %645 = vmatprep.subr.mxu0 0.0
  %646 = vmatpush2.msra.mxu0 0.0
  %647 = vmatprep.subr.mxu0 0.0
  %648 = vmatpush2.msra.mxu0 0.0
  %649 = vmatprep.subr.mxu0 0.0
  %650 = vmatpush2.msra.mxu0 0.0
  %651 = vmatprep.subr.mxu0 0.0
  %652 = vmatpush2.msra.mxu0 0.0
  %653 = vmatprep.subr.mxu0 0.0
  %654 = vmatpush2.msra.mxu0 0.0
  %655 = vmatprep.subr.mxu0 0.0
  %656 = vmatpush2.msra.mxu0 0.0
  %657 = vmatprep.subr.mxu0 0.0
  %658 = vmatpush2.msra.mxu0 0.0
  %659 = vmatprep.subr.mxu0 0.0
  %660 = vmatpush2.msra.mxu0 0.0
  %661 = vmatprep.subr.mxu0 0.0
  %662 = vmatpush2.msra.mxu0 0.0
  %663 = vmatprep.subr.mxu0 0.0
  %664 = vmatpush2.msra.mxu0 0.0
  %665 = vmatprep.subr.mxu0 0.0
  %666 = vmatpush2.msra.mxu0 0.0
  %667 = vmatprep.subr.mxu0 0.0
  %668 = vmatpush2.msra.mxu0 0.0
  %669 = vmatprep.mubr.f32.mxu0 0.0
  %670 = vmatmul.mubr.f32.gmra.mxu0 %v515
  %v671 = vpop.f32.mrf.mxu0
  %v672 = vadd.f32 0.0, %v671
  %v673 = vpop.f32.mrf.mxu0
  %674 = vdwg.mxu0
  %v675 = vmul.f32 %v602, 0.001953125
  %v676 = vmul.f32 %v672, 0.001953125
  %v677 = vmul.f32 %v675, %v675
  %v678 = vsub.f32 %v676, %v677
  %v679 = vld [vmem:[%s2] sm:$0x1]
  %v680 = vadd.f32 %v678, 1e-05
  %v681 = vrsqrt.pop %v680
  %v682 = vmul.f32 %v679, %v681
  %v683 = vld [vmem:[%s3] sm:$0x1]
  %v684 = vmul.f32 %v675, %v682
  %v685 = vsub.f32 %v683, %v684
  %v686 = vld [vmem:[%s5] sm:$0xff]
  %vm687 = vcmask 64512
  %v689 = vsel %vm687, %v682, 0
  %691 = vmatprep.subr.mxu0 0.0
  %692 = vmatpush1.msra.mxu0 0.0
  %693 = vmatprep.subr.mxu0 0.0
  %694 = vmatpush1.msra.mxu0 0.0
  %695 = vmatprep.subr.mxu0 0.0
  %696 = vmatpush1.msra.mxu0 0.0
  %697 = vmatprep.subr.mxu0 0.0
  %698 = vmatpush1.msra.mxu0 0.0
  %699 = vmatprep.subr.mxu0 0.0
  %700 = vmatpush1.msra.mxu0 0.0
  %701 = vmatprep.subr.mxu0 0.0
  %702 = vmatpush1.msra.mxu0 0.0
  %703 = vmatprep.subr.mxu0 0.0
  %704 = vmatpush1.msra.mxu0 0.0
  %705 = vmatprep.subr.mxu0 0.0
  %706 = vmatpush1.msra.mxu0 0.0
  %707 = vmatprep.subr.mxu0 0.0
  %708 = vmatpush1.msra.mxu0 0.0
  %709 = vmatprep.subr.mxu0 0.0
  %710 = vmatpush1.msra.mxu0 0.0
  %711 = vmatprep.subr.mxu0 0.0
  %712 = vmatpush1.msra.mxu0 0.0
  %713 = vmatprep.subr.mxu0 0.0
  %714 = vmatpush1.msra.mxu0 0.0
  %715 = vmatprep.subr.mxu0 0.0
  %716 = vmatpush1.msra.mxu0 0.0
  %717 = vmatprep.subr.mxu0 0.0
  %718 = vmatpush1.msra.mxu0 0.0
  %719 = vmatprep.subr.mxu0 0.0
  %720 = vmatpush1.msra.mxu0 0.0
  %721 = vmatprep.subr.mxu0 0.0
  %722 = vmatpush1.msra.mxu0 %v686
  %723 = vmatprep.subr.mxu0 0.0
  %724 = vmatpush2.msra.mxu0 0.0
  %725 = vmatprep.subr.mxu0 0.0
  %726 = vmatpush2.msra.mxu0 0.0
  %727 = vmatprep.subr.mxu0 0.0
  %728 = vmatpush2.msra.mxu0 0.0
  %729 = vmatprep.subr.mxu0 0.0
  %730 = vmatpush2.msra.mxu0 0.0
  %731 = vmatprep.subr.mxu0 0.0
  %732 = vmatpush2.msra.mxu0 0.0
  %733 = vmatprep.subr.mxu0 0.0
  %734 = vmatpush2.msra.mxu0 0.0
  %735 = vmatprep.subr.mxu0 0.0
  %736 = vmatpush2.msra.mxu0 0.0
  %737 = vmatprep.subr.mxu0 0.0
  %738 = vmatpush2.msra.mxu0 0.0
  %739 = vmatprep.subr.mxu0 0.0
  %740 = vmatpush2.msra.mxu0 0.0
  %741 = vmatprep.subr.mxu0 0.0
  %742 = vmatpush2.msra.mxu0 0.0
  %743 = vmatprep.subr.mxu0 0.0
  %744 = vmatpush2.msra.mxu0 0.0
  %745 = vmatprep.subr.mxu0 0.0
  %746 = vmatpush2.msra.mxu0 0.0
  %747 = vmatprep.subr.mxu0 0.0
  %748 = vmatpush2.msra.mxu0 0.0
  %749 = vmatprep.subr.mxu0 0.0
  %750 = vmatpush2.msra.mxu0 0.0
  %751 = vmatprep.subr.mxu0 0.0
  %752 = vmatpush2.msra.mxu0 0.0
  %753 = vmatprep.subr.mxu0 0.0
  %754 = vmatpush2.msra.mxu0 0.0
  %755 = vmatprep.mubr.f32.mxu0 0.0
  %756 = vmatmul.mubr.f32.gmra.mxu0 %v689
  %v757 = vpop.f32.mrf.mxu0
  %v758 = vadd.f32 0.0, %v757
  %v759 = vpop.f32.mrf.mxu0
  %760 = vdwg.mxu0
  %v762 = vsel %vm687, %v685, 0
  %764 = vmatprep.subr.mxu0 0.0
  %765 = vmatpush1.msra.mxu0 0.0
  %766 = vmatprep.subr.mxu0 0.0
  %767 = vmatpush1.msra.mxu0 0.0
  %768 = vmatprep.subr.mxu0 0.0
  %769 = vmatpush1.msra.mxu0 0.0
  %770 = vmatprep.subr.mxu0 0.0
  %771 = vmatpush1.msra.mxu0 0.0
  %772 = vmatprep.subr.mxu0 0.0
  %773 = vmatpush1.msra.mxu0 0.0
  %774 = vmatprep.subr.mxu0 0.0
  %775 = vmatpush1.msra.mxu0 0.0
  %776 = vmatprep.subr.mxu0 0.0
  %777 = vmatpush1.msra.mxu0 0.0
  %778 = vmatprep.subr.mxu0 0.0
  %779 = vmatpush1.msra.mxu0 0.0
  %780 = vmatprep.subr.mxu0 0.0
  %781 = vmatpush1.msra.mxu0 0.0
  %782 = vmatprep.subr.mxu0 0.0
  %783 = vmatpush1.msra.mxu0 0.0
  %784 = vmatprep.subr.mxu0 0.0
  %785 = vmatpush1.msra.mxu0 0.0
  %786 = vmatprep.subr.mxu0 0.0
  %787 = vmatpush1.msra.mxu0 0.0
  %788 = vmatprep.subr.mxu0 0.0
  %789 = vmatpush1.msra.mxu0 0.0
  %790 = vmatprep.subr.mxu0 0.0
  %791 = vmatpush1.msra.mxu0 0.0
  %792 = vmatprep.subr.mxu0 0.0
  %793 = vmatpush1.msra.mxu0 0.0
  %794 = vmatprep.subr.mxu0 0.0
  %795 = vmatpush1.msra.mxu0 %v686
  %796 = vmatprep.subr.mxu0 0.0
  %797 = vmatpush2.msra.mxu0 0.0
  %798 = vmatprep.subr.mxu0 0.0
  %799 = vmatpush2.msra.mxu0 0.0
  %800 = vmatprep.subr.mxu0 0.0
  %801 = vmatpush2.msra.mxu0 0.0
  %802 = vmatprep.subr.mxu0 0.0
  %803 = vmatpush2.msra.mxu0 0.0
  %804 = vmatprep.subr.mxu0 0.0
  %805 = vmatpush2.msra.mxu0 0.0
  %806 = vmatprep.subr.mxu0 0.0
  %807 = vmatpush2.msra.mxu0 0.0
  %808 = vmatprep.subr.mxu0 0.0
  %809 = vmatpush2.msra.mxu0 0.0
  %810 = vmatprep.subr.mxu0 0.0
  %811 = vmatpush2.msra.mxu0 0.0
  %812 = vmatprep.subr.mxu0 0.0
  %813 = vmatpush2.msra.mxu0 0.0
  %814 = vmatprep.subr.mxu0 0.0
  %815 = vmatpush2.msra.mxu0 0.0
  %816 = vmatprep.subr.mxu0 0.0
  %817 = vmatpush2.msra.mxu0 0.0
  %818 = vmatprep.subr.mxu0 0.0
  %819 = vmatpush2.msra.mxu0 0.0
  %820 = vmatprep.subr.mxu0 0.0
  %821 = vmatpush2.msra.mxu0 0.0
  %822 = vmatprep.subr.mxu0 0.0
  %823 = vmatpush2.msra.mxu0 0.0
  %824 = vmatprep.subr.mxu0 0.0
  %825 = vmatpush2.msra.mxu0 0.0
  %826 = vmatprep.subr.mxu0 0.0
  %827 = vmatpush2.msra.mxu0 0.0
  %828 = vmatprep.mubr.f32.mxu0 0.0
  %829 = vmatmul.mubr.f32.gmra.mxu0 %v762
  %v830 = vpop.f32.mrf.mxu0
  %v831 = vadd.f32 0.0, %v830
  %v832 = vpop.f32.mrf.mxu0
  %833 = vdwg.mxu0
  %v834 = vld [vmem:[%s6] sm:$0xff]
  %v835 = vld [vmem:[%s6 + $0x8] sm:$0xff]
  %v836 = vld [vmem:[%s6 + $0x10] sm:$0xff]
  %v837 = vld [vmem:[%s6 + $0x18] sm:$0xff]
  %v838 = vlaneseq
  %v839 = vshrl.u32 %v838, 7
  %v840 = vsub.s32 0, %v839
  %v841 = vrot.slane %v758, %v840
  %v842 = vmul.f32 %v834, %v841
  %v843 = vmul.f32 %v835, %v841
  %v844 = vmul.f32 %v836, %v841
  %v845 = vmul.f32 %v837, %v841
  %v846 = vlaneseq
  %v847 = vshrl.u32 %v846, 7
  %v848 = vsub.s32 0, %v847
  %v849 = vrot.slane %v831, %v848
  %v850 = vadd.f32 %v842, %v849
  %v851 = vadd.f32 %v843, %v849
  %v852 = vadd.f32 %v844, %v849
  %v853 = vadd.f32 %v845, %v849
  %v854 = vsub.f32 0.0, %v850
  %v855 = vsub.f32 0.0, %v851
  %v856 = vsub.f32 0.0, %v852
  %v857 = vsub.f32 0.0, %v853
  %v858 = vmul.f32 %v854, 1.442695
  %v859 = vpow.pop %v858
  %v860 = vmul.f32 %v855, 1.442695
  %v861 = vpow.pop %v860
  %v862 = vmul.f32 %v856, 1.442695
  %v863 = vpow.pop %v862
  %v864 = vmul.f32 %v857, 1.442695
  %v865 = vpow.pop %v864
  %v866 = vadd.f32 %v859, 1.0
  %v867 = vadd.f32 %v861, 1.0
  %v868 = vadd.f32 %v863, 1.0
  %v869 = vadd.f32 %v865, 1.0
  %v870 = vrcp.pop %v866
  %v871 = vrcp.pop %v867
  %v872 = vrcp.pop %v868
  %v873 = vrcp.pop %v869
  %v874 = vmul.f32 %v850, %v870
  %v875 = vmul.f32 %v851, %v871
  %v876 = vmul.f32 %v852, %v872
  %v877 = vmul.f32 %v853, %v873
  %878 = vst [vmem:[%s6] sm:$0xff] %v874
  %879 = vst [vmem:[%s6 + $0x8] sm:$0xff] %v875
  %880 = vst [vmem:[%s6 + $0x10] sm:$0xff] %v876
  %881 = vst [vmem:[%s6 + $0x18] sm:$0xff] %v877
  // Predicated region
  $region26: #{conv_bn_silu.1} parent=0 // pred_check
    _
  $region27: #{conv_bn_silu.1} parent=0 // pred_check_branch
    %883 = sbr.rel (0) target = $region29
  $region28: #{conv_bn_silu.1} parent=0 // pred_region
    _
  $region29: #{conv_bn_silu.1} parent=0 // pred_fallthru
    _
  // Predicated region
  $region30: #{conv_bn_silu.1} parent=0 // pred_check
    _
  $region31: #{conv_bn_silu.1} parent=0 // pred_check_branch
    %885 = sbr.rel (0) target = $region33
  $region32: #{conv_bn_silu.1} parent=0 // pred_region
    _
  $region33: #{conv_bn_silu.1} parent=0 // pred_fallthru
    _

</llo_original>
